<compile_context>
chip_gen: v5e
topology: v5e:2x2
jax: 0.10.0
libtpu: 0.0.40
codegen_flags: <defaults>
</compile_context>

<pallas_src>
import jax
import jax.numpy as jnp
from jax.experimental import pallas as pl
from jax.experimental.pallas import tpu as pltpu

_LANES = 128


def _hard_sigmoid_kernel(x_ref, o_ref):
    x = x_ref[...]
    relu6 = jnp.clip(x + 3.0, 0.0, 6.0)
    # x * (x * relu6(x+3) / 6)  -- matches the PP_LCNet module exactly.
    out = x * (x * relu6 * (1.0 / 6.0))
    o_ref[...] = out.astype(o_ref.dtype)


def hard_sigmoid(x: jax.Array, *, max_block_rows: int = 2048) -> jax.Array:
    """HardSigmoid(x) = x * HardSwish(x), elementwise, any shape/float dtype."""
    orig_shape = x.shape
    orig_dtype = x.dtype
    n = x.size

    x_flat = x.reshape(-1)

    rem = n % _LANES
    if rem != 0:
        # Uncommon path (conv activations are normally multiples of 128):
        # pad only the ragged partial last row. f(0) == 0 so zero-pad is safe.
        x_flat = jnp.pad(x_flat, (0, _LANES - rem))

    rows = x_flat.size // _LANES
    x2d = x_flat.reshape(rows, _LANES)  # contiguous reshape: no copy

    # Block rows: as large as possible (1 MiB f32 blocks) while staying a
    # multiple of 8 (sublane tile); a block equal to the full row extent is
    # always legal, even if rows < 8.
    block_rows = rows if rows <= max_block_rows else max_block_rows

    grid = (pl.cdiv(rows, block_rows),)

    out2d = pl.pallas_call(
        _hard_sigmoid_kernel,
        out_shape=jax.ShapeDtypeStruct((rows, _LANES), orig_dtype),
        grid_spec=pl.GridSpec(
            grid=grid,
            in_specs=[pl.BlockSpec((block_rows, _LANES), lambda i: (i, 0))],
            out_specs=pl.BlockSpec((block_rows, _LANES), lambda i: (i, 0)),
        ),
        compiler_params=pltpu.CompilerParams(
            dimension_semantics=("parallel",),
        ),
    )(x2d)

    out_flat = out2d.reshape(-1)
    if rem != 0:
        out_flat = out_flat[:n]
    return out_flat.reshape(orig_shape)


def _reference(x):
    xf = x.astype(jnp.float32)
    relu6 = jnp.clip(xf + 3.0, 0.0, 6.0)
    return (xf * (xf * relu6 / 6.0)).astype(x.dtype)


if __name__ == "__main__":
    key = jax.random.PRNGKey(0)

    # Primary check: NCHW conv-style activation, size divisible by 128
    # (common path: no padding, no extra copies).
    x = jax.random.normal(key, (2, 4, 16, 16), dtype=jnp.float32) * 4.0
    out = jax.block_until_ready(hard_sigmoid(x))
    ref = _reference(x)
    assert out.shape == x.shape and out.dtype == x.dtype
    assert jnp.allclose(out, ref, atol=1e-5, rtol=1e-5), "mismatch vs reference"

    # Secondary check: ragged size (not a multiple of 128) and a multi-step
    # grid with a partially out-of-bounds last block (exercises OOB masking).
    key2 = jax.random.PRNGKey(1)
    x2 = jax.random.normal(key2, (2, 4, 50, 50), dtype=jnp.float32) * 4.0
    out2 = jax.block_until_ready(hard_sigmoid(x2, max_block_rows=64))
    ref2 = _reference(x2)
    assert out2.shape == x2.shape and out2.dtype == x2.dtype
    assert jnp.allclose(out2, ref2, atol=1e-5, rtol=1e-5), "mismatch vs reference (ragged)"

    print("KERNEL_OK")
</pallas_src>

<mosaic_0001>
module attributes {stable_mosaic.version = 11 : i64} {
  func.func @_hard_sigmoid_kernel(%arg0: i32, %arg1: memref<16x128xf32, #tpu.memory_space<vmem>>, %arg2: memref<16x128xf32, #tpu.memory_space<vmem>>) attributes {dimension_semantics = [#tpu.dimension_semantics<parallel>], iteration_bounds = array<i64: 1>, scalar_prefetch = 0 : i64, scratch_operands = 0 : i64, tpu.core_type = #tpu.core_type<tc>, window_params = [{transform_indices = @transform_0, window_bounds = array<i64: 16, 128>}, {transform_indices = @transform_1, window_bounds = array<i64: 16, 128>}]} {
    %c0 = arith.constant 0 : index
    %c0_0 = arith.constant 0 : index
    %0 = vector.load %arg1[%c0, %c0_0] : memref<16x128xf32, #tpu.memory_space<vmem>>, vector<16x128xf32>
    %cst = arith.constant 3.000000e+00 : f32
    %1 = vector.broadcast %cst : f32 to vector<16x128xf32>
    %2 = arith.addf %0, %1 : vector<16x128xf32>
    %cst_1 = arith.constant 0.000000e+00 : f32
    %cst_2 = arith.constant 6.000000e+00 : f32
    %3 = vector.broadcast %cst_1 : f32 to vector<16x128xf32>
    %4 = arith.maximumf %3, %2 : vector<16x128xf32>
    %5 = vector.broadcast %cst_2 : f32 to vector<16x128xf32>
    %6 = arith.minimumf %5, %4 : vector<16x128xf32>
    %7 = arith.mulf %0, %6 : vector<16x128xf32>
    %cst_3 = arith.constant 0.166666672 : f32
    %8 = vector.broadcast %cst_3 : f32 to vector<16x128xf32>
    %9 = arith.mulf %7, %8 : vector<16x128xf32>
    %10 = arith.mulf %0, %9 : vector<16x128xf32>
    %c0_4 = arith.constant 0 : index
    %c0_5 = arith.constant 0 : index
    %11 = vector.load %arg2[%c0_4, %c0_5] : memref<16x128xf32, #tpu.memory_space<vmem>>, vector<16x128xf32>
    tpu.vector_store %arg2[%c0_4, %c0_5], %10 {strides = array<i32>} : memref<16x128xf32, #tpu.memory_space<vmem>>, vector<16x128xf32>,
    return
  }
  func.func @transform_0(%arg0: i32) -> (i32, i32) {
    %c0_i32 = arith.constant 0 : i32
    %c0_i32_0 = arith.constant 0 : i32
    return %arg0, %c0_i32 : i32, i32
  }
  func.func @transform_1(%arg0: i32) -> (i32, i32) {
    %c0_i32 = arith.constant 0 : i32
    %c0_i32_0 = arith.constant 0 : i32
    return %arg0, %c0_i32 : i32, i32
  }
}

</mosaic_0001>

<llo_original>
// kernel: tpu_custom_call.1
$region0: #{tpu_custom_call.1}
  #allocation0 [shape = 'u32[]', space=smem, size = 0x4, offset = 0x4, fixed_abs, tag = 'smem constant byte address 0x4 - core index']
  #allocation1 [shape = 'u32[72,128]{1,0:T(1,128)}', space=vmem, size = 0x9000, scoped, tag = 'internal scratch']
  %s0 = inlined_call_operand.hbm [shape: f32[16,128], index: 0, kind: input, shape index: {}]
  %s1 = inlined_call_operand.hbm [shape: f32[16,128], index: 1, kind: output, shape index: {}]
  %s2 = sld [smem:[#allocation0]]
  $region18: #{tpu_custom_call.1} parent=0
    _
  %s4 = ssub.s32 1, %s2
  %s5 = scalar_select 0, %s4, %s2
  $region1: #{tpu_custom_call.1} parent=0
    #allocation2 [shape = 'u8[8192]{0}', space=vmem, size = 0x2000, scoped, tag = 'input window, operand 0, single buffered']
    #allocation3 [shape = 's32[1]{0}', space=sflag, size = 0x4, scoped, tag = 'scoped memory for tpu_custom_call.1']
    #allocation4 [shape = 's32[1]{0}', space=sflag, size = 0x4, scoped, tag = 'scoped memory for tpu_custom_call.1']
    #allocation5 [shape = 'u8[8192]{0}', space=vmem, size = 0x2000, scoped, tag = 'output window, operand 0, single buffered']
    %6 = vsyncpa [#allocation3], 0
    %7 = vsyncpa [#allocation4], 0
    // Predicated region
    $region2: #{tpu_custom_call.1} parent=1 // pred_check
      _
    $region3: #{tpu_custom_call.1} parent=1 // pred_check_branch
      %9 = sbr.rel (0) target = $region5
    $region4: #{tpu_custom_call.1} parent=1 // pred_region
      %11 = vsyncadd [#allocation3], 0
      %s12 = sshll.u32 %s0, 4
      %s13 = int_to_ptr.hbm [resolvable:$true] %s12
      %s14 = sshll.u32 [#allocation2], 4
      %s15 = int_to_ptr.vmem [resolvable:$true] %s14
      %20 = dma.hbm_to_vmem [thread:$0]  %s13, 256, %s15, [#allocation3], 128, 128, 8
    $region5: #{tpu_custom_call.1} parent=1 // pred_fallthru
      _
    // Predicated region
    $region6: #{tpu_custom_call.1} parent=1 // pred_check
      _
    $region7: #{tpu_custom_call.1} parent=1 // pred_check_branch
      %22 = sbr.rel (0) target = $region9
    $region8: #{tpu_custom_call.1} parent=1 // pred_region
      %24 = dma.done [#allocation3], 256
    $region9: #{tpu_custom_call.1} parent=1 // pred_fallthru
      _
    %v25 = vld [vmem:[#allocation2] sm:$0xff]
    %v26 = vld [vmem:[#allocation2 + $0x8] sm:$0xff]
    %v27 = vadd.f32 %v25, 3.0
    %v28 = vadd.f32 %v26, 3.0
    %v29 = vmax.f32 %v27, 0.0
    %v30 = vmax.f32 %v28, 0.0
    %v31 = vmin.f32 %v29, 6.0
    %v32 = vmin.f32 %v30, 6.0
    %v33 = vmul.f32 %v25, %v31
    %v34 = vmul.f32 %v26, %v32
    %v35 = vmul.f32 %v33, 0.16666667
    %v36 = vmul.f32 %v34, 0.16666667
    %v37 = vmul.f32 %v25, %v35
    %v38 = vmul.f32 %v26, %v36
    %39 = vst [vmem:[#allocation5] sm:$0xff] %v37
    %40 = vst [vmem:[#allocation5 + $0x8] sm:$0xff] %v38
    // Predicated region
    $region10: #{tpu_custom_call.1} parent=1 // pred_check
      _
    $region11: #{tpu_custom_call.1} parent=1 // pred_check_branch
      %42 = sbr.rel (0) target = $region13
    $region12: #{tpu_custom_call.1} parent=1 // pred_region
      %44 = vsyncadd [#allocation4], 0
      %s45 = sshll.u32 [#allocation5], 4
      %s46 = int_to_ptr.vmem [resolvable:$true] %s45
      %s47 = sshll.u32 %s1, 4
      %s48 = int_to_ptr.hbm [resolvable:$true] %s47
      %53 = dma.vmem_to_hbm [thread:$0]  %s46, 256, %s48, [#allocation4], 128, 128, 8
    $region13: #{tpu_custom_call.1} parent=1 // pred_fallthru
      _
    // Predicated region
    $region14: #{tpu_custom_call.1} parent=1 // pred_check
      _
    $region15: #{tpu_custom_call.1} parent=1 // pred_check_branch
      %55 = sbr.rel (0) target = $region17
    $region16: #{tpu_custom_call.1} parent=1 // pred_region
      %57 = dma.done [#allocation4], 256
    $region17: #{tpu_custom_call.1} parent=1 // pred_fallthru
      _
    %58 = vsyncpa [#allocation3], 1
    %59 = vsyncpa [#allocation4], 1

</llo_original>
